<compile_context>
chip_gen: v7x
topology: tpu7x:2x2x1
jax: 0.10.0
libtpu: 0.0.40
codegen_flags: <defaults>
</compile_context>

<pallas_src>
import functools

import jax
import jax.numpy as jnp
from jax import lax
from jax.experimental import pallas as pl
from jax.experimental.pallas import tpu as pltpu


def encoder_kernel(xfs_ref, w1_ref, w2f_ref, out_ref, *, L1, TL):
    """One (batch-tile, length-tile) step of the fused Encoder forward.

    xfs_ref : (2, TN, Lfs) f32   folded input: xfs[r, n, p] = xpad[n, 2(p-1)+r]
                                 (p = 0 and p > L1+1 are zeros); lane axis = length.
    w1_ref  : (C1, K1)     f32   w1r[c, k]        = W1[c, 0, k]
    w2f_ref : (K2*C1, C2)  bf16  w2f[k*C1+ci, co] = W2[co, ci, k]
    out_ref : (TN, C2, TL) f32   NCL output tile, TL % 128 == 0 (lane-dense store).
    """
    TN = out_ref.shape[0]
    C2 = out_ref.shape[1]
    C1, K1 = w1_ref.shape
    K2 = w2f_ref.shape[0] // C1
    R = TL + 8                       # hp rows computed per tile (need TL + K2 - 1)

    j = pl.program_id(1)
    base = pl.multiple_of(j * TL, 128)          # lane-aligned window start

    # Lane-aligned folded-input windows (one per input parity row).
    xw0 = xfs_ref[0, :, pl.ds(base, R + 8)]     # (TN, R + 8) f32
    xw1 = xfs_ref[1, :, pl.ds(base, R + 8)]

    # ---- conv1 (Cin=1, k=4, stride 2, pad 1), channel-major (lane = length) ----
    # hp row m of this tile holds conv1 output t1 = j*TL + m - 1; its input taps
    # are xpad[2*t1 + 2q + r] = xw_r[:, m + q].
    w1 = w1_ref[...]
    h = jnp.zeros((TN, C1, R), jnp.float32)
    for k in range(K1):
        q, r = divmod(k, 2)
        xw = xw0 if r == 0 else xw1
        col = xw[:, q:q + R]                                    # (TN, R)
        h = h + col[:, None, :] * w1[:, k:k + 1][None, :, :]    # (TN, C1, R)

    # ---- LeakyReLU(0.2) in f32, then conv2's zero padding via a row mask ----
    h = jnp.maximum(h, 0.2 * h)
    m_global = j * TL + lax.broadcasted_iota(jnp.int32, (1, 1, R), 2)
    valid = jnp.logical_and(m_global >= 1, m_global <= L1)
    hp_cl = jnp.where(valid, h, 0.0).astype(jnp.bfloat16)       # cast once -> bf16

    # ---- im2col patch (built once) + a single K=128 bf16 MXU matmul ----
    hp = jnp.swapaxes(hp_cl, 1, 2)                              # (TN, R, C1)
    patch = jnp.concatenate([hp[:, k:k + TL, :] for k in range(K2)], axis=2)
    patch = patch.reshape(TN * TL, K2 * C1)                     # (TN*TL, 128) lane-dense LHS
    out_nlc = jnp.dot(patch, w2f_ref[...], preferred_element_type=jnp.float32)

    # ---- NLC -> NCL transpose (XLU slot) and unmasked, lane-dense store ----
    out_ref[...] = jnp.swapaxes(out_nlc.reshape(TN, TL, C2), 1, 2).astype(out_ref.dtype)


def _default_tiling():
    """(block_n, vmem_limit_bytes) per TPU generation (conservative fallback)."""
    try:
        kind = jax.devices()[0].device_kind.lower()
    except Exception:
        kind = ""
    if ("v5 lite" in kind) or ("v5e" in kind) or ("v6" in kind):
        # 128 MiB physical VMEM: bigger batch tiles amortize per-step overhead
        # for this DMA-bound kernel.
        return 64, 96 * 1024 * 1024
    # v7x-class (64 MiB physical VMEM) or unknown chip: conservative sizing.
    return 16, 48 * 1024 * 1024


def encoder_forward(z, w1, w2, *, block_n=None, tile_len=512, vmem_limit_bytes=None):
    """z: (N, 1, L) float32 (PyTorch NCL). Returns (N, 64, L//2 - 1) float32."""
    d_bn, d_vm = _default_tiling()
    block_n = d_bn if block_n is None else block_n
    vmem_limit_bytes = d_vm if vmem_limit_bytes is None else vmem_limit_bytes
    return _encoder_forward(z, w1, w2, block_n=int(block_n), tile_len=int(tile_len),
                            vmem_limit_bytes=int(vmem_limit_bytes))


@functools.partial(jax.jit, static_argnames=("block_n", "tile_len", "vmem_limit_bytes"))
def _encoder_forward(z, w1, w2, *, block_n, tile_len, vmem_limit_bytes):
    N, Cin, L = z.shape
    if Cin != 1 or L % 2 != 0 or L < 4:
        raise ValueError(f"expected (N, 1, even L>=4) input, got {z.shape}")
    C1, _, K1 = w1.shape          # (32, 1, 4)
    C2, _, K2 = w2.shape          # (64, 32, 4)
    L1 = L // 2                   # conv1 output length
    L2 = L1 - 1                   # conv2 output length

    # Length tiling: TL is a multiple of 128 so every output store is lane-dense.
    tl_cap = -(-L2 // 128) * 128
    TL = min(max(128, (tile_len // 128) * 128), tl_cap)
    nl = -(-L2 // TL)
    L2out = nl * TL               # padded output length (sliced back below)
    R = TL + 8                    # hp rows per tile
    Lfs = L2out + 16              # folded / shifted / zero-extended input length

    # Batch tiling: TN is a multiple of 8 (or the full batch) so the folded
    # input block's sublane dim stays (8,128)-aligned.
    if N <= block_n:
        TN = N
    else:
        TN = max(8, (block_n // 8) * 8)
    Np = -(-N // TN) * TN
    nb = Np // TN

    # Layout-only glue (tiny vs. the (N, 64, L2) output): zero-pad + stride-2
    # fold the input with the length on the lane axis; re-layout the weights.
    xpad = jnp.pad(z[:, 0, :].astype(jnp.float32), ((0, Np - N), (1, 1)))   # (Np, L+2)
    xf = xpad.reshape(Np, L1 + 1, 2)                   # xf[n, p, r] = xpad[n, 2p + r]
    xfs = jnp.pad(jnp.transpose(xf, (2, 0, 1)),        # (2, Np, L1+1)
                  ((0, 0), (0, 0), (1, Lfs - (L1 + 1) - 1)))
    w1r = w1[:, 0, :].astype(jnp.float32)                                   # (C1, K1)
    w2f = jnp.transpose(w2, (2, 1, 0)).reshape(K2 * C1, C2).astype(jnp.bfloat16)

    kernel = functools.partial(encoder_kernel, L1=L1, TL=TL)
    out = pl.pallas_call(
        kernel,
        out_shape=jax.ShapeDtypeStruct((Np, C2, L2out), jnp.float32),
        grid_spec=pltpu.PrefetchScalarGridSpec(
            num_scalar_prefetch=0,
            grid=(nb, nl),
            in_specs=[
                pl.BlockSpec((2, TN, Lfs), lambda i, j: (0, i, 0)),
                pl.BlockSpec((C1, K1), lambda i, j: (0, 0)),
                pl.BlockSpec((K2 * C1, C2), lambda i, j: (0, 0)),
            ],
            out_specs=pl.BlockSpec((TN, C2, TL), lambda i, j: (i, 0, j)),
        ),
        compiler_params=pltpu.CompilerParams(
            dimension_semantics=("parallel", "parallel"),
            vmem_limit_bytes=vmem_limit_bytes,
        ),
    )(xfs, w1r, w2f)

    # Drop batch / length padding (kept out of the kernel so stores stay
    # unmasked and lane-dense).
    return out[:N, :, :L2]


if __name__ == "__main__":
    key = jax.random.PRNGKey(0)
    k1, k2, k3, k4 = jax.random.split(key, 4)

    # Deterministic synthetic weights matching the nn.Conv1d parameter shapes.
    w1 = jax.random.normal(k2, (32, 1, 4), jnp.float32) * 0.1
    w2 = jax.random.normal(k3, (64, 32, 4), jnp.float32) * 0.1

    def reference(z):
        h = lax.conv_general_dilated(z, w1, (2,), [(1, 1)],
                                     dimension_numbers=("NCH", "OIH", "NCH"))
        h = jnp.where(h > 0, h, 0.2 * h)
        return lax.conv_general_dilated(h, w2, (1,), [(1, 1)],
                                        dimension_numbers=("NCH", "OIH", "NCH"))

    # Small smoke test (single grid step).
    z = jax.random.normal(k1, (2, 1, 16), jnp.float32)
    out = jax.block_until_ready(encoder_forward(z, w1, w2))
    ref = reference(z)
    assert out.shape == (2, 64, 7), out.shape
    # conv2 runs on the MXU in bf16 (f32 accumulation) -> bf16-level tolerance.
    assert jnp.allclose(out, ref, atol=2e-2, rtol=2e-2), float(jnp.max(jnp.abs(out - ref)))

    # Multi-step grid: batch tiling + batch padding + two length tiles.
    z2 = jax.random.normal(k4, (12, 1, 272), jnp.float32)
    out2 = jax.block_until_ready(encoder_forward(z2, w1, w2, block_n=8, tile_len=128))
    ref2 = reference(z2)
    assert out2.shape == (12, 64, 135), out2.shape
    assert jnp.allclose(out2, ref2, atol=2e-2, rtol=2e-2), float(jnp.max(jnp.abs(out2 - ref2)))

    print("KERNEL_OK")
</pallas_src>

<mosaic_0001>
module attributes {stable_mosaic.version = 11 : i64} {
  func.func @encoder_kernel(%arg0: i32, %arg1: i32, %arg2: memref<2x2x144xf32, #tpu.memory_space<vmem>>, %arg3: memref<32x4xf32, #tpu.memory_space<vmem>>, %arg4: memref<128x64xbf16, #tpu.memory_space<vmem>>, %arg5: memref<2x64x128xf32, #tpu.memory_space<vmem>>) attributes {dimension_semantics = [#tpu.dimension_semantics<parallel>, #tpu.dimension_semantics<parallel>], iteration_bounds = array<i64: 1, 1>, scalar_prefetch = 0 : i64, scratch_operands = 0 : i64, tpu.core_type = #tpu.core_type<tc>, window_params = [{transform_indices = @transform_0, window_bounds = array<i64: 2, 2, 144>}, {pipeline_mode = #tpu.pipeline_mode<synchronous>, transform_indices = @transform_1, window_bounds = array<i64: 32, 4>}, {pipeline_mode = #tpu.pipeline_mode<synchronous>, transform_indices = @transform_2, window_bounds = array<i64: 128, 64>}, {transform_indices = @transform_3, window_bounds = array<i64: 2, 64, 128>}]} {
    %c128_i32 = arith.constant 128 : i32
    %0 = arith.muli %arg1, %c128_i32 : i32
    %1 = tpu.assume_multiple %0, 128 : i32
    %c0 = arith.constant 0 : index
    %c0_0 = arith.constant 0 : index
    %2 = arith.index_cast %1 : i32 to index
    %3 = vector.load %arg2[%c0, %c0_0, %2] : memref<2x2x144xf32, #tpu.memory_space<vmem>>, vector<1x2x144xf32>
    %4 = vector.shape_cast %3 : vector<1x2x144xf32> to vector<2x144xf32>
    %c1 = arith.constant 1 : index
    %c0_1 = arith.constant 0 : index
    %5 = arith.index_cast %1 : i32 to index
    %6 = vector.load %arg2[%c1, %c0_1, %5] : memref<2x2x144xf32, #tpu.memory_space<vmem>>, vector<1x2x144xf32>
    %7 = vector.shape_cast %6 : vector<1x2x144xf32> to vector<2x144xf32>
    %c0_2 = arith.constant 0 : index
    %c0_3 = arith.constant 0 : index
    %8 = vector.load %arg3[%c0_2, %c0_3] : memref<32x4xf32, #tpu.memory_space<vmem>>, vector<32x4xf32>
    %cst = arith.constant 0.000000e+00 : f32
    %9 = vector.broadcast %cst : f32 to vector<2x32x136xf32>
    %10 = vector.extract_strided_slice %4 {offsets = [0, 0], sizes = [2, 136], strides = [1, 1]} : vector<2x144xf32> to vector<2x136xf32>
    %11 = vector.shape_cast %10 : vector<2x136xf32> to vector<2x1x136xf32>
    %12 = vector.extract_strided_slice %8 {offsets = [0, 0], sizes = [32, 1], strides = [1, 1]} : vector<32x4xf32> to vector<32x1xf32>
    %13 = vector.shape_cast %12 : vector<32x1xf32> to vector<1x32x1xf32>
    %14 = vector.broadcast %11 : vector<2x1x136xf32> to vector<2x32x136xf32>
    %15 = vector.broadcast %13 : vector<1x32x1xf32> to vector<2x32x136xf32>
    %16 = arith.mulf %14, %15 : vector<2x32x136xf32>
    %17 = arith.addf %9, %16 : vector<2x32x136xf32>
    %18 = vector.extract_strided_slice %7 {offsets = [0, 0], sizes = [2, 136], strides = [1, 1]} : vector<2x144xf32> to vector<2x136xf32>
    %19 = vector.shape_cast %18 : vector<2x136xf32> to vector<2x1x136xf32>
    %20 = vector.extract_strided_slice %8 {offsets = [0, 1], sizes = [32, 1], strides = [1, 1]} : vector<32x4xf32> to vector<32x1xf32>
    %21 = vector.shape_cast %20 : vector<32x1xf32> to vector<1x32x1xf32>
    %22 = vector.broadcast %19 : vector<2x1x136xf32> to vector<2x32x136xf32>
    %23 = vector.broadcast %21 : vector<1x32x1xf32> to vector<2x32x136xf32>
    %24 = arith.mulf %22, %23 : vector<2x32x136xf32>
    %25 = arith.addf %17, %24 : vector<2x32x136xf32>
    %26 = vector.extract_strided_slice %4 {offsets = [0, 1], sizes = [2, 136], strides = [1, 1]} : vector<2x144xf32> to vector<2x136xf32>
    %27 = vector.shape_cast %26 : vector<2x136xf32> to vector<2x1x136xf32>
    %28 = vector.extract_strided_slice %8 {offsets = [0, 2], sizes = [32, 1], strides = [1, 1]} : vector<32x4xf32> to vector<32x1xf32>
    %29 = vector.shape_cast %28 : vector<32x1xf32> to vector<1x32x1xf32>
    %30 = vector.broadcast %27 : vector<2x1x136xf32> to vector<2x32x136xf32>
    %31 = vector.broadcast %29 : vector<1x32x1xf32> to vector<2x32x136xf32>
    %32 = arith.mulf %30, %31 : vector<2x32x136xf32>
    %33 = arith.addf %25, %32 : vector<2x32x136xf32>
    %34 = vector.extract_strided_slice %7 {offsets = [0, 1], sizes = [2, 136], strides = [1, 1]} : vector<2x144xf32> to vector<2x136xf32>
    %35 = vector.shape_cast %34 : vector<2x136xf32> to vector<2x1x136xf32>
    %36 = vector.extract_strided_slice %8 {offsets = [0, 3], sizes = [32, 1], strides = [1, 1]} : vector<32x4xf32> to vector<32x1xf32>
    %37 = vector.shape_cast %36 : vector<32x1xf32> to vector<1x32x1xf32>
    %38 = vector.broadcast %35 : vector<2x1x136xf32> to vector<2x32x136xf32>
    %39 = vector.broadcast %37 : vector<1x32x1xf32> to vector<2x32x136xf32>
    %40 = arith.mulf %38, %39 : vector<2x32x136xf32>
    %41 = arith.addf %33, %40 : vector<2x32x136xf32>
    %cst_4 = arith.constant 2.000000e-01 : f32
    %42 = vector.broadcast %cst_4 : f32 to vector<2x32x136xf32>
    %43 = arith.mulf %42, %41 : vector<2x32x136xf32>
    %44 = arith.maximumf %41, %43 : vector<2x32x136xf32>
    %c128_i32_5 = arith.constant 128 : i32
    %45 = arith.muli %arg1, %c128_i32_5 : i32
    %46 = tpu.iota {dimensions = array<i32: 2>} : vector<1x1x136xi32>
    %47 = vector.broadcast %45 : i32 to vector<1x1x136xi32>
    %48 = arith.addi %47, %46 : vector<1x1x136xi32>
    %c1_i32 = arith.constant 1 : i32
    %49 = vector.broadcast %c1_i32 : i32 to vector<1x1x136xi32>
    %50 = arith.cmpi sge, %48, %49 : vector<1x1x136xi32>
    %c8_i32 = arith.constant 8 : i32
    %51 = vector.broadcast %c8_i32 : i32 to vector<1x1x136xi32>
    %52 = arith.cmpi sle, %48, %51 : vector<1x1x136xi32>
    %53 = arith.andi %50, %52 : vector<1x1x136xi1>
    %cst_6 = arith.constant 0.000000e+00 : f32
    %54 = vector.shape_cast %53 : vector<1x1x136xi1> to vector<1x1x136xi1>
    %55 = vector.broadcast %54 : vector<1x1x136xi1> to vector<2x32x136xi1>
    %56 = vector.broadcast %cst_6 : f32 to vector<2x32x136xf32>
    %57 = arith.select %55, %44, %56 : vector<2x32x136xi1>, vector<2x32x136xf32>
    %58 = arith.truncf %57 : vector<2x32x136xf32> to vector<2x32x136xbf16>
    %59 = tpu.transpose %58, [0, 2, 1] : vector<2x32x136xbf16> -> vector<2x136x32xbf16>
    %60 = vector.extract_strided_slice %59 {offsets = [0, 0, 0], sizes = [2, 128, 32], strides = [1, 1, 1]} : vector<2x136x32xbf16> to vector<2x128x32xbf16>
    %61 = vector.extract_strided_slice %59 {offsets = [0, 1, 0], sizes = [2, 128, 32], strides = [1, 1, 1]} : vector<2x136x32xbf16> to vector<2x128x32xbf16>
    %62 = vector.extract_strided_slice %59 {offsets = [0, 2, 0], sizes = [2, 128, 32], strides = [1, 1, 1]} : vector<2x136x32xbf16> to vector<2x128x32xbf16>
    %63 = vector.extract_strided_slice %59 {offsets = [0, 3, 0], sizes = [2, 128, 32], strides = [1, 1, 1]} : vector<2x136x32xbf16> to vector<2x128x32xbf16>
    %64 = tpu.concatenate %60, %61, %62, %63 in 2 : vector<2x128x32xbf16>, vector<2x128x32xbf16>, vector<2x128x32xbf16>, vector<2x128x32xbf16> -> vector<2x128x128xbf16>
    %65 = vector.shape_cast %64 : vector<2x128x128xbf16> to vector<256x128xbf16>
    %c0_7 = arith.constant 0 : index
    %c0_8 = arith.constant 0 : index
    %66 = vector.load %arg4[%c0_7, %c0_8] : memref<128x64xbf16, #tpu.memory_space<vmem>>, vector<128x64xbf16>
    %cst_9 = arith.constant dense<0.000000e+00> : vector<256x64xf32>
    %67 = tpu.matmul %65, %66, %cst_9 {dimension_numbers = #tpu.dot_dimension_numbers<[1], [0], [0], [1], [0, 0, 1, 1], [], []>} : vector<256x128xbf16>, vector<128x64xbf16>, vector<256x64xf32> -> vector<256x64xf32>
    %68 = vector.shape_cast %67 : vector<256x64xf32> to vector<2x128x64xf32>
    %69 = tpu.transpose %68, [0, 2, 1] : vector<2x128x64xf32> -> vector<2x64x128xf32>
    %c0_10 = arith.constant 0 : index
    %c0_11 = arith.constant 0 : index
    %c0_12 = arith.constant 0 : index
    %70 = vector.load %arg5[%c0_10, %c0_11, %c0_12] : memref<2x64x128xf32, #tpu.memory_space<vmem>>, vector<2x64x128xf32>
    tpu.vector_store %arg5[%c0_10, %c0_11, %c0_12], %69 {strides = array<i32>} : memref<2x64x128xf32, #tpu.memory_space<vmem>>, vector<2x64x128xf32>,
    return
  }
  func.func @transform_0(%arg0: i32, %arg1: i32) -> (i32, i32, i32) {
    %c0_i32 = arith.constant 0 : i32
    %c0_i32_0 = arith.constant 0 : i32
    %c0_i32_1 = arith.constant 0 : i32
    return %c0_i32, %arg0, %c0_i32_0 : i32, i32, i32
  }
  func.func @transform_1(%arg0: i32, %arg1: i32) -> (i32, i32) {
    %c0_i32 = arith.constant 0 : i32
    %c0_i32_0 = arith.constant 0 : i32
    %c0_i32_1 = arith.constant 0 : i32
    return %c0_i32, %c0_i32_0 : i32, i32
  }
  func.func @transform_2(%arg0: i32, %arg1: i32) -> (i32, i32) {
    %c0_i32 = arith.constant 0 : i32
    %c0_i32_0 = arith.constant 0 : i32
    %c0_i32_1 = arith.constant 0 : i32
    return %c0_i32, %c0_i32_0 : i32, i32
  }
  func.func @transform_3(%arg0: i32, %arg1: i32) -> (i32, i32, i32) {
    %c0_i32 = arith.constant 0 : i32
    %c0_i32_0 = arith.constant 0 : i32
    return %arg0, %c0_i32, %arg1 : i32, i32, i32
  }
}

</mosaic_0001>

<llo_original>
// kernel: _encoder_forward.1
$region0: #{_encoder_forward.1}
  #allocation0 [shape = 'u32[]', space=smem, size = 0x4, offset = 0x4, fixed_abs, tag = 'smem constant byte address 0x4 - core index']
  #allocation1 [shape = 'u32[144,128]{1,0:T(1,128)}', space=vmem, size = 0x12000, scoped, tag = 'internal scratch']
  %s0 = inlined_call_operand.vmem [shape: f32[2,2,144], index: 0, kind: input, shape index: {}]
  %s1 = inlined_call_operand.vmem [shape: f32[32,4], index: 1, kind: input, shape index: {}]
  %s2 = inlined_call_operand.vmem [shape: bf16[128,64], index: 2, kind: input, shape index: {}]
  %s3 = inlined_call_operand.vmem [shape: f32[2,64,128], index: 3, kind: output, shape index: {}]
  %s4 = sld [smem:[#allocation0]]
  $region22: #{_encoder_forward.1} parent=0
    _
  %s6 = ssub.s32 1, %s4
  %s7 = scalar_select 0, %s6, %s4
  // Predicated region
  $region2: #{_encoder_forward.1} parent=0 // pred_check
    _
  $region3: #{_encoder_forward.1} parent=0 // pred_check_branch
    %9 = sbr.rel (0) target = $region5
  $region4: #{_encoder_forward.1} parent=0 // pred_region
    _
  $region5: #{_encoder_forward.1} parent=0 // pred_fallthru
    _
  // Predicated region
  $region6: #{_encoder_forward.1} parent=0 // pred_check
    _
  $region7: #{_encoder_forward.1} parent=0 // pred_check_branch
    %11 = sbr.rel (0) target = $region9
  $region8: #{_encoder_forward.1} parent=0 // pred_region
    _
  $region9: #{_encoder_forward.1} parent=0 // pred_fallthru
    _
  // Predicated region
  $region10: #{_encoder_forward.1} parent=0 // pred_check
    _
  $region11: #{_encoder_forward.1} parent=0 // pred_check_branch
    %13 = sbr.rel (0) target = $region13
  $region12: #{_encoder_forward.1} parent=0 // pred_region
    _
  $region13: #{_encoder_forward.1} parent=0 // pred_fallthru
    _
  %s15 = smul.u32 0, 128
  %s16 = sshra.s32 %s15, 7
  %s17 = sand.u32 %s15, 127
  %s18 = smul.addr %s16, 2
  %s19 = scalar_lea.vmem %s0, %s18
  %v20 = vld [vmem:[%s19] sm:$0xf]
  %s21 = sadd.s32 %s16, 2
  %s22 = smul.addr %s21, 2
  %s23 = scalar_lea.vmem %s0, %s22
  %v24 = vld [vmem:[%s23] sm:$0xf]
  %v25 = vld [vmem:[%s1] sm:$0xff]
  %v26 = vld [vmem:[%s1 + $0x8] sm:$0xff]
  %v27 = vld [vmem:[%s1 + $0x10] sm:$0xff]
  %v28 = vld [vmem:[%s1 + $0x18] sm:$0xff]
  %v31 = vunpack.c.l.s4 1966171168
  %v32 = vunpack.c.0.s8 %v31
  %v33 = vlaneseq
  %v34 = vshrl.u32 %v33, 7
  %v35 = vsub.s32 %v32, %v34
  %v36 = vrot.slane %v20, %v35
  %v37 = vcombine.high %v36, %v36
  %v38 = vlaneseq
  %v39 = vshrl.u32 %v38, 7
  %v40 = vsub.s32 0, %v39
  %v41 = vrot.slane %v36, %v40
  %v42 = vlaneseq
  %v43 = vshrl.u32 %v42, 7
  %v44 = vsub.s32 1, %v43
  %v45 = vrot.slane %v36, %v44
  %v46 = vlaneseq
  %v47 = vshrl.u32 %v46, 7
  %v48 = vsub.s32 0, %v47
  %v49 = vrot.slane %v37, %v48
  %v50 = vlaneseq
  %v51 = vshrl.u32 %v50, 7
  %v52 = vsub.s32 1, %v51
  %v53 = vrot.slane %v37, %v52
  %59 = vset.pattern.permute.xlu0 0
  %60 = vperm.xlu0 %59, %v25
  %v61 = vpop.permute.xlu0 %60
  %64 = vset.pattern.permute.xlu0 0
  %65 = vperm.xlu0 %64, %v26
  %v66 = vpop.permute.xlu0 %65
  %69 = vset.pattern.permute.xlu0 0
  %70 = vperm.xlu0 %69, %v27
  %v71 = vpop.permute.xlu0 %70
  %74 = vset.pattern.permute.xlu0 0
  %75 = vperm.xlu0 %74, %v28
  %v76 = vpop.permute.xlu0 %75
  %v78 = vmul.f32 %v41, %v61
  %v79 = vmul.f32 %v45, %v61
  %v80 = vmul.f32 %v41, %v66
  %v81 = vmul.f32 %v45, %v66
  %v82 = vmul.f32 %v41, %v71
  %v83 = vmul.f32 %v45, %v71
  %v84 = vmul.f32 %v41, %v76
  %v85 = vmul.f32 %v45, %v76
  %v86 = vmul.f32 %v49, %v61
  %v87 = vmul.f32 %v53, %v61
  %v88 = vmul.f32 %v49, %v66
  %v89 = vmul.f32 %v53, %v66
  %v90 = vmul.f32 %v49, %v71
  %v91 = vmul.f32 %v53, %v71
  %v92 = vmul.f32 %v49, %v76
  %v93 = vmul.f32 %v53, %v76
  %v94 = vadd.f32 %v78, 0.0
  %v95 = vadd.f32 %v79, 0.0
  %v96 = vadd.f32 %v80, 0.0
  %v97 = vadd.f32 %v81, 0.0
  %v98 = vadd.f32 %v82, 0.0
  %v99 = vadd.f32 %v83, 0.0
  %v100 = vadd.f32 %v84, 0.0
  %v101 = vadd.f32 %v85, 0.0
  %v102 = vadd.f32 %v86, 0.0
  %v103 = vadd.f32 %v87, 0.0
  %v104 = vadd.f32 %v88, 0.0
  %v105 = vadd.f32 %v89, 0.0
  %v106 = vadd.f32 %v90, 0.0
  %v107 = vadd.f32 %v91, 0.0
  %v108 = vadd.f32 %v92, 0.0
  %v109 = vadd.f32 %v93, 0.0
  %v112 = vunpack.c.l.s4 1966171168
  %v113 = vunpack.c.0.s8 %v112
  %v114 = vlaneseq
  %v115 = vshrl.u32 %v114, 7
  %v116 = vsub.s32 %v113, %v115
  %v117 = vrot.slane %v24, %v116
  %v118 = vcombine.high %v117, %v117
  %v119 = vlaneseq
  %v120 = vshrl.u32 %v119, 7
  %v121 = vsub.s32 0, %v120
  %v122 = vrot.slane %v117, %v121
  %v123 = vlaneseq
  %v124 = vshrl.u32 %v123, 7
  %v125 = vsub.s32 1, %v124
  %v126 = vrot.slane %v117, %v125
  %v127 = vlaneseq
  %v128 = vshrl.u32 %v127, 7
  %v129 = vsub.s32 0, %v128
  %v130 = vrot.slane %v118, %v129
  %v131 = vlaneseq
  %v132 = vshrl.u32 %v131, 7
  %v133 = vsub.s32 1, %v132
  %v134 = vrot.slane %v118, %v133
  %139 = vset.pattern.permute.xlu0 1
  %140 = vperm.xlu0 %139, %v25
  %v141 = vpop.permute.xlu0 %140
  %143 = vset.pattern.permute.xlu0 1
  %144 = vperm.xlu0 %143, %v26
  %v145 = vpop.permute.xlu0 %144
  %147 = vset.pattern.permute.xlu0 1
  %148 = vperm.xlu0 %147, %v27
  %v149 = vpop.permute.xlu0 %148
  %151 = vset.pattern.permute.xlu0 1
  %152 = vperm.xlu0 %151, %v28
  %v153 = vpop.permute.xlu0 %152
  %v155 = vmul.f32 %v122, %v141
  %v156 = vmul.f32 %v126, %v141
  %v157 = vmul.f32 %v122, %v145
  %v158 = vmul.f32 %v126, %v145
  %v159 = vmul.f32 %v122, %v149
  %v160 = vmul.f32 %v126, %v149
  %v161 = vmul.f32 %v122, %v153
  %v162 = vmul.f32 %v126, %v153
  %v163 = vmul.f32 %v130, %v141
  %v164 = vmul.f32 %v134, %v141
  %v165 = vmul.f32 %v130, %v145
  %v166 = vmul.f32 %v134, %v145
  %v167 = vmul.f32 %v130, %v149
  %v168 = vmul.f32 %v134, %v149
  %v169 = vmul.f32 %v130, %v153
  %v170 = vmul.f32 %v134, %v153
  %v171 = vadd.f32 %v94, %v155
  %v172 = vadd.f32 %v95, %v156
  %v173 = vadd.f32 %v96, %v157
  %v174 = vadd.f32 %v97, %v158
  %v175 = vadd.f32 %v98, %v159
  %v176 = vadd.f32 %v99, %v160
  %v177 = vadd.f32 %v100, %v161
  %v178 = vadd.f32 %v101, %v162
  %v179 = vadd.f32 %v102, %v163
  %v180 = vadd.f32 %v103, %v164
  %v181 = vadd.f32 %v104, %v165
  %v182 = vadd.f32 %v105, %v166
  %v183 = vadd.f32 %v106, %v167
  %v184 = vadd.f32 %v107, %v168
  %v185 = vadd.f32 %v108, %v169
  %v186 = vadd.f32 %v109, %v170
  %187 = vset.pattern.permute.xlu0 2
  %188 = vperm.xlu0 %187, %v25
  %v189 = vpop.permute.xlu0 %188
  %191 = vset.pattern.permute.xlu0 2
  %192 = vperm.xlu0 %191, %v26
  %v193 = vpop.permute.xlu0 %192
  %195 = vset.pattern.permute.xlu0 2
  %196 = vperm.xlu0 %195, %v27
  %v197 = vpop.permute.xlu0 %196
  %199 = vset.pattern.permute.xlu0 2
  %200 = vperm.xlu0 %199, %v28
  %v201 = vpop.permute.xlu0 %200
  %v203 = vmul.f32 %v41, %v189
  %v204 = vmul.f32 %v45, %v189
  %v205 = vmul.f32 %v41, %v193
  %v206 = vmul.f32 %v45, %v193
  %v207 = vmul.f32 %v41, %v197
  %v208 = vmul.f32 %v45, %v197
  %v209 = vmul.f32 %v41, %v201
  %v210 = vmul.f32 %v45, %v201
  %v211 = vmul.f32 %v49, %v189
  %v212 = vmul.f32 %v53, %v189
  %v213 = vmul.f32 %v49, %v193
  %v214 = vmul.f32 %v53, %v193
  %v215 = vmul.f32 %v49, %v197
  %v216 = vmul.f32 %v53, %v197
  %v217 = vmul.f32 %v49, %v201
  %v218 = vmul.f32 %v53, %v201
  %235 = vrot.lane.b32.xlu0 %v203, 127
  %v236 = vpop.permute.xlu0 %235
  %237 = vrot.lane.b32.xlu0 %v204, 127
  %v238 = vpop.permute.xlu0 %237
  %239 = vrot.lane.b32.xlu0 %v205, 127
  %v240 = vpop.permute.xlu0 %239
  %241 = vrot.lane.b32.xlu0 %v206, 127
  %v242 = vpop.permute.xlu0 %241
  %243 = vrot.lane.b32.xlu0 %v207, 127
  %v244 = vpop.permute.xlu0 %243
  %245 = vrot.lane.b32.xlu0 %v208, 127
  %v246 = vpop.permute.xlu0 %245
  %247 = vrot.lane.b32.xlu0 %v209, 127
  %v248 = vpop.permute.xlu0 %247
  %249 = vrot.lane.b32.xlu0 %v210, 127
  %v250 = vpop.permute.xlu0 %249
  %251 = vrot.lane.b32.xlu0 %v211, 127
  %v252 = vpop.permute.xlu0 %251
  %253 = vrot.lane.b32.xlu0 %v212, 127
  %v254 = vpop.permute.xlu0 %253
  %255 = vrot.lane.b32.xlu0 %v213, 127
  %v256 = vpop.permute.xlu0 %255
  %257 = vrot.lane.b32.xlu0 %v214, 127
  %v258 = vpop.permute.xlu0 %257
  %259 = vrot.lane.b32.xlu0 %v215, 127
  %v260 = vpop.permute.xlu0 %259
  %261 = vrot.lane.b32.xlu0 %v216, 127
  %v262 = vpop.permute.xlu0 %261
  %263 = vrot.lane.b32.xlu0 %v217, 127
  %v264 = vpop.permute.xlu0 %263
  %265 = vrot.lane.b32.xlu0 %v218, 127
  %v266 = vpop.permute.xlu0 %265
  %vm267 = vcmask 1039360
  %v268 = vsel %vm267, %v236, %v238
  %v269 = vsel %vm267, %v240, %v242
  %v270 = vsel %vm267, %v244, %v246
  %v271 = vsel %vm267, %v248, %v250
  %v272 = vsel %vm267, %v252, %v254
  %v273 = vsel %vm267, %v256, %v258
  %v274 = vsel %vm267, %v260, %v262
  %v275 = vsel %vm267, %v264, %v266
  %v292 = vadd.f32 %v171, %v268
  %v293 = vadd.f32 %v172, %v238
  %v294 = vadd.f32 %v173, %v269
  %v295 = vadd.f32 %v174, %v242
  %v296 = vadd.f32 %v175, %v270
  %v297 = vadd.f32 %v176, %v246
  %v298 = vadd.f32 %v177, %v271
  %v299 = vadd.f32 %v178, %v250
  %v300 = vadd.f32 %v179, %v272
  %v301 = vadd.f32 %v180, %v254
  %v302 = vadd.f32 %v181, %v273
  %v303 = vadd.f32 %v182, %v258
  %v304 = vadd.f32 %v183, %v274
  %v305 = vadd.f32 %v184, %v262
  %v306 = vadd.f32 %v185, %v275
  %v307 = vadd.f32 %v186, %v266
  %308 = vset.pattern.permute.xlu0 3
  %309 = vperm.xlu0 %308, %v25
  %v310 = vpop.permute.xlu0 %309
  %312 = vset.pattern.permute.xlu0 3
  %313 = vperm.xlu0 %312, %v26
  %v314 = vpop.permute.xlu0 %313
  %316 = vset.pattern.permute.xlu0 3
  %317 = vperm.xlu0 %316, %v27
  %v318 = vpop.permute.xlu0 %317
  %320 = vset.pattern.permute.xlu0 3
  %321 = vperm.xlu0 %320, %v28
  %v322 = vpop.permute.xlu0 %321
  %v324 = vmul.f32 %v122, %v310
  %v325 = vmul.f32 %v126, %v310
  %v326 = vmul.f32 %v122, %v314
  %v327 = vmul.f32 %v126, %v314
  %v328 = vmul.f32 %v122, %v318
  %v329 = vmul.f32 %v126, %v318
  %v330 = vmul.f32 %v122, %v322
  %v331 = vmul.f32 %v126, %v322
  %v332 = vmul.f32 %v130, %v310
  %v333 = vmul.f32 %v134, %v310
  %v334 = vmul.f32 %v130, %v314
  %v335 = vmul.f32 %v134, %v314
  %v336 = vmul.f32 %v130, %v318
  %v337 = vmul.f32 %v134, %v318
  %v338 = vmul.f32 %v130, %v322
  %v339 = vmul.f32 %v134, %v322
  %356 = vrot.lane.b32.xlu0 %v324, 127
  %v357 = vpop.permute.xlu0 %356
  %358 = vrot.lane.b32.xlu0 %v325, 127
  %v359 = vpop.permute.xlu0 %358
  %360 = vrot.lane.b32.xlu0 %v326, 127
  %v361 = vpop.permute.xlu0 %360
  %362 = vrot.lane.b32.xlu0 %v327, 127
  %v363 = vpop.permute.xlu0 %362
  %364 = vrot.lane.b32.xlu0 %v328, 127
  %v365 = vpop.permute.xlu0 %364
  %366 = vrot.lane.b32.xlu0 %v329, 127
  %v367 = vpop.permute.xlu0 %366
  %368 = vrot.lane.b32.xlu0 %v330, 127
  %v369 = vpop.permute.xlu0 %368
  %370 = vrot.lane.b32.xlu0 %v331, 127
  %v371 = vpop.permute.xlu0 %370
  %372 = vrot.lane.b32.xlu0 %v332, 127
  %v373 = vpop.permute.xlu0 %372
  %374 = vrot.lane.b32.xlu0 %v333, 127
  %v375 = vpop.permute.xlu0 %374
  %376 = vrot.lane.b32.xlu0 %v334, 127
  %v377 = vpop.permute.xlu0 %376
  %378 = vrot.lane.b32.xlu0 %v335, 127
  %v379 = vpop.permute.xlu0 %378
  %380 = vrot.lane.b32.xlu0 %v336, 127
  %v381 = vpop.permute.xlu0 %380
  %382 = vrot.lane.b32.xlu0 %v337, 127
  %v383 = vpop.permute.xlu0 %382
  %384 = vrot.lane.b32.xlu0 %v338, 127
  %v385 = vpop.permute.xlu0 %384
  %386 = vrot.lane.b32.xlu0 %v339, 127
  %v387 = vpop.permute.xlu0 %386
  %v388 = vsel %vm267, %v357, %v359
  %v389 = vsel %vm267, %v361, %v363
  %v390 = vsel %vm267, %v365, %v367
  %v391 = vsel %vm267, %v369, %v371
  %v392 = vsel %vm267, %v373, %v375
  %v393 = vsel %vm267, %v377, %v379
  %v394 = vsel %vm267, %v381, %v383
  %v395 = vsel %vm267, %v385, %v387
  %v412 = vadd.f32 %v292, %v388
  %v413 = vadd.f32 %v293, %v359
  %v414 = vadd.f32 %v294, %v389
  %v415 = vadd.f32 %v295, %v363
  %v416 = vadd.f32 %v296, %v390
  %v417 = vadd.f32 %v297, %v367
  %v418 = vadd.f32 %v298, %v391
  %v419 = vadd.f32 %v299, %v371
  %v420 = vadd.f32 %v300, %v392
  %v421 = vadd.f32 %v301, %v375
  %v422 = vadd.f32 %v302, %v393
  %v423 = vadd.f32 %v303, %v379
  %v424 = vadd.f32 %v304, %v394
  %v425 = vadd.f32 %v305, %v383
  %v426 = vadd.f32 %v306, %v395
  %v427 = vadd.f32 %v307, %v387
  %v428 = vmul.f32 %v412, 0.2
  %v429 = vmul.f32 %v413, 0.2
  %v430 = vmul.f32 %v414, 0.2
  %v431 = vmul.f32 %v415, 0.2
  %v432 = vmul.f32 %v416, 0.2
  %v433 = vmul.f32 %v417, 0.2
  %v434 = vmul.f32 %v418, 0.2
  %v435 = vmul.f32 %v419, 0.2
  %v436 = vmul.f32 %v420, 0.2
  %v437 = vmul.f32 %v421, 0.2
  %v438 = vmul.f32 %v422, 0.2
  %v439 = vmul.f32 %v423, 0.2
  %v440 = vmul.f32 %v424, 0.2
  %v441 = vmul.f32 %v425, 0.2
  %v442 = vmul.f32 %v426, 0.2
  %v443 = vmul.f32 %v427, 0.2
  %v444 = vmax.f32 %v412, %v428
  %v445 = vmax.f32 %v413, %v429
  %v446 = vmax.f32 %v414, %v430
  %v447 = vmax.f32 %v415, %v431
  %v448 = vmax.f32 %v416, %v432
  %v449 = vmax.f32 %v417, %v433
  %v450 = vmax.f32 %v418, %v434
  %v451 = vmax.f32 %v419, %v435
  %v452 = vmax.f32 %v420, %v436
  %v453 = vmax.f32 %v421, %v437
  %v454 = vmax.f32 %v422, %v438
  %v455 = vmax.f32 %v423, %v439
  %v456 = vmax.f32 %v424, %v440
  %v457 = vmax.f32 %v425, %v441
  %v458 = vmax.f32 %v426, %v442
  %v459 = vmax.f32 %v427, %v443
  %v460 = vlaneseq
  %v461 = vand.u32 %v460, 127
  %v462 = vadd.s32 %v461, 128
  %v463 = vstv %s15
  %v464 = vadd.s32 %v463, %v461
  %v465 = vadd.s32 %v463, %v462
  %vm466 = vcmp.ge.s32.totalorder %v464, 1
  %vm467 = vcmp.ge.s32.totalorder %v465, 1
  %vm468 = vcmp.le.s32.totalorder %v464, 8
  %vm469 = vcmp.le.s32.totalorder %v465, 8
  %vm470 = vmand %vm466, %vm468
  %vm471 = vmand %vm467, %vm469
  %v472 = vsel %vm470, 1, 0
  %v473 = vsel %vm471, 1, 0
  %vm474 = vcmp.eq.s32.totalorder %v472, 1
  %vm475 = vcmp.eq.s32.totalorder %v473, 1
  %v476 = vsel %vm474, %v444, 0.0
  %v477 = vsel %vm475, %v445, 0.0
  %v478 = vsel %vm474, %v446, 0.0
  %v479 = vsel %vm475, %v447, 0.0
  %v480 = vsel %vm474, %v448, 0.0
  %v481 = vsel %vm475, %v449, 0.0
  %v482 = vsel %vm474, %v450, 0.0
  %v483 = vsel %vm475, %v451, 0.0
  %v484 = vsel %vm474, %v452, 0.0
  %v485 = vsel %vm475, %v453, 0.0
  %v486 = vsel %vm474, %v454, 0.0
  %v487 = vsel %vm475, %v455, 0.0
  %v488 = vsel %vm474, %v456, 0.0
  %v489 = vsel %vm475, %v457, 0.0
  %v490 = vsel %vm474, %v458, 0.0
  %v491 = vsel %vm475, %v459, 0.0
  %v492 = vpack.c.bf16 %v478, %v476
  %v493 = vpack.c.bf16 %v479, %v477
  %v494 = vpack.c.bf16 %v482, %v480
  %v495 = vpack.c.bf16 %v483, %v481
  %v496 = vpack.c.bf16 %v486, %v484
  %v497 = vpack.c.bf16 %v487, %v485
  %v498 = vpack.c.bf16 %v490, %v488
  %v499 = vpack.c.bf16 %v491, %v489
  %500 = vxpose.xlu0.c.b16.start [1/8] %v492, 128
  %501 = vxpose.xlu0.c.b16.cont [2/8] %v494, 128
  %502 = vxpose.xlu0.c.b16.cont [3/8] 0, 128
  %503 = vxpose.xlu0.c.b16.cont [4/8] 0, 128
  %504 = vxpose.xlu0.c.b16.cont [5/8] 0, 128
  %505 = vxpose.xlu0.c.b16.cont [6/8] 0, 128
  %506 = vxpose.xlu0.c.b16.cont [7/8] 0, 128
  %507 = vxpose.xlu0.c.b16.end [8/8] 0, 128
  %v508 = vpop.trf.xlu0
  %v509 = vpop.trf.xlu0
  %v510 = vpop.trf.xlu0
  %v511 = vpop.trf.xlu0
  %v512 = vpop.trf.xlu0
  %v513 = vpop.trf.xlu0
  %v514 = vpop.trf.xlu0
  %v515 = vpop.trf.xlu0
  %516 = vxpose.xlu0.c.b16.start [1/8] %v493, 128
  %517 = vxpose.xlu0.c.b16.cont [2/8] %v495, 128
  %518 = vxpose.xlu0.c.b16.cont [3/8] 0, 128
  %519 = vxpose.xlu0.c.b16.cont [4/8] 0, 128
  %520 = vxpose.xlu0.c.b16.cont [5/8] 0, 128
  %521 = vxpose.xlu0.c.b16.cont [6/8] 0, 128
  %522 = vxpose.xlu0.c.b16.cont [7/8] 0, 128
  %523 = vxpose.xlu0.c.b16.end [8/8] 0, 128
  %v524 = vpop.trf.xlu0
  %v525 = vpop.trf.xlu0
  %v526 = vpop.trf.xlu0
  %v527 = vpop.trf.xlu0
  %v528 = vpop.trf.xlu0
  %v529 = vpop.trf.xlu0
  %v530 = vpop.trf.xlu0
  %v531 = vpop.trf.xlu0
  %532 = vxpose.xlu0.c.b16.start [1/8] %v496, 128
  %533 = vxpose.xlu0.c.b16.cont [2/8] %v498, 128
  %534 = vxpose.xlu0.c.b16.cont [3/8] 0, 128
  %535 = vxpose.xlu0.c.b16.cont [4/8] 0, 128
  %536 = vxpose.xlu0.c.b16.cont [5/8] 0, 128
  %537 = vxpose.xlu0.c.b16.cont [6/8] 0, 128
  %538 = vxpose.xlu0.c.b16.cont [7/8] 0, 128
  %539 = vxpose.xlu0.c.b16.end [8/8] 0, 128
  %v540 = vpop.trf.xlu0
  %v541 = vpop.trf.xlu0
  %v542 = vpop.trf.xlu0
  %v543 = vpop.trf.xlu0
  %v544 = vpop.trf.xlu0
  %v545 = vpop.trf.xlu0
  %v546 = vpop.trf.xlu0
  %v547 = vpop.trf.xlu0
  %548 = vxpose.xlu0.c.b16.start [1/8] %v497, 128
  %549 = vxpose.xlu0.c.b16.cont [2/8] %v499, 128
  %550 = vxpose.xlu0.c.b16.cont [3/8] 0, 128
  %551 = vxpose.xlu0.c.b16.cont [4/8] 0, 128
  %552 = vxpose.xlu0.c.b16.cont [5/8] 0, 128
  %553 = vxpose.xlu0.c.b16.cont [6/8] 0, 128
  %554 = vxpose.xlu0.c.b16.cont [7/8] 0, 128
  %555 = vxpose.xlu0.c.b16.end [8/8] 0, 128
  %v556 = vpop.trf.xlu0
  %v557 = vpop.trf.xlu0
  %v558 = vpop.trf.xlu0
  %v559 = vpop.trf.xlu0
  %v560 = vpop.trf.xlu0
  %v561 = vpop.trf.xlu0
  %v562 = vpop.trf.xlu0
  %v563 = vpop.trf.xlu0
  %vm564 = vsmask.f32 7424
  %v566 = vshrl.u32 %v508, 16
  %v568 = vshll.u32 %v508, 16
  %v570 = vrot.slane %v568, 1
  %v571 = vor.u32 %v566, %v570
  %v573 = vshll.u32 %v509, 16
  %v575 = vrot.slane %v573, 1
  %v576 = vsel %vm564, %v571, %v575
  %v577 = vshrl.u32 %v509, 16
  %v579 = vor.u32 %v577, %v575
  %v581 = vshll.u32 %v510, 16
  %v583 = vrot.slane %v581, 1
  %v584 = vsel %vm564, %v579, %v583
  %v585 = vshrl.u32 %v510, 16
  %v587 = vor.u32 %v585, %v583
  %v589 = vshll.u32 %v511, 16
  %v591 = vrot.slane %v589, 1
  %v592 = vsel %vm564, %v587, %v591
  %v593 = vshrl.u32 %v511, 16
  %v595 = vor.u32 %v593, %v591
  %v597 = vshll.u32 %v512, 16
  %v599 = vrot.slane %v597, 1
  %v600 = vsel %vm564, %v595, %v599
  %v601 = vshrl.u32 %v512, 16
  %v603 = vor.u32 %v601, %v599
  %v605 = vshll.u32 %v513, 16
  %v607 = vrot.slane %v605, 1
  %v608 = vsel %vm564, %v603, %v607
  %v609 = vshrl.u32 %v513, 16
  %v611 = vor.u32 %v609, %v607
  %v613 = vshll.u32 %v514, 16
  %v615 = vrot.slane %v613, 1
  %v616 = vsel %vm564, %v611, %v615
  %v617 = vshrl.u32 %v514, 16
  %v619 = vor.u32 %v617, %v615
  %v621 = vshll.u32 %v515, 16
  %v623 = vrot.slane %v621, 1
  %v624 = vsel %vm564, %v619, %v623
  %v625 = vshrl.u32 %v515, 16
  %v627 = vor.u32 %v625, %v623
  %v629 = vshll.u32 %v524, 16
  %v631 = vrot.slane %v629, 1
  %v632 = vsel %vm564, %v627, %v631
  %v634 = vshrl.u32 %v540, 16
  %v636 = vshll.u32 %v540, 16
  %v638 = vrot.slane %v636, 1
  %v639 = vor.u32 %v634, %v638
  %v641 = vshll.u32 %v541, 16
  %v643 = vrot.slane %v641, 1
  %v644 = vsel %vm564, %v639, %v643
  %v645 = vshrl.u32 %v541, 16
  %v647 = vor.u32 %v645, %v643
  %v649 = vshll.u32 %v542, 16
  %v651 = vrot.slane %v649, 1
  %v652 = vsel %vm564, %v647, %v651
  %v653 = vshrl.u32 %v542, 16
  %v655 = vor.u32 %v653, %v651
  %v657 = vshll.u32 %v543, 16
  %v659 = vrot.slane %v657, 1
  %v660 = vsel %vm564, %v655, %v659
  %v661 = vshrl.u32 %v543, 16
  %v663 = vor.u32 %v661, %v659
  %v665 = vshll.u32 %v544, 16
  %v667 = vrot.slane %v665, 1
  %v668 = vsel %vm564, %v663, %v667
  %v669 = vshrl.u32 %v544, 16
  %v671 = vor.u32 %v669, %v667
  %v673 = vshll.u32 %v545, 16
  %v675 = vrot.slane %v673, 1
  %v676 = vsel %vm564, %v671, %v675
  %v677 = vshrl.u32 %v545, 16
  %v679 = vor.u32 %v677, %v675
  %v681 = vshll.u32 %v546, 16
  %v683 = vrot.slane %v681, 1
  %v684 = vsel %vm564, %v679, %v683
  %v685 = vshrl.u32 %v546, 16
  %v687 = vor.u32 %v685, %v683
  %v689 = vshll.u32 %v547, 16
  %v691 = vrot.slane %v689, 1
  %v692 = vsel %vm564, %v687, %v691
  %v693 = vshrl.u32 %v547, 16
  %v695 = vor.u32 %v693, %v691
  %v697 = vshll.u32 %v556, 16
  %v699 = vrot.slane %v697, 1
  %v700 = vsel %vm564, %v695, %v699
  %701 = vrot.lane.b32.xlu0 %v576, 32
  %v702 = vpop.permute.xlu0 %701
  %703 = vrot.lane.b32.xlu0 %v584, 32
  %v704 = vpop.permute.xlu0 %703
  %705 = vrot.lane.b32.xlu0 %v592, 32
  %v706 = vpop.permute.xlu0 %705
  %707 = vrot.lane.b32.xlu0 %v600, 32
  %v708 = vpop.permute.xlu0 %707
  %709 = vrot.lane.b32.xlu0 %v608, 32
  %v710 = vpop.permute.xlu0 %709
  %711 = vrot.lane.b32.xlu0 %v616, 32
  %v712 = vpop.permute.xlu0 %711
  %713 = vrot.lane.b32.xlu0 %v624, 32
  %v714 = vpop.permute.xlu0 %713
  %715 = vrot.lane.b32.xlu0 %v632, 32
  %v716 = vpop.permute.xlu0 %715
  %717 = vrot.lane.b32.xlu0 %v644, 32
  %v718 = vpop.permute.xlu0 %717
  %719 = vrot.lane.b32.xlu0 %v652, 32
  %v720 = vpop.permute.xlu0 %719
  %721 = vrot.lane.b32.xlu0 %v660, 32
  %v722 = vpop.permute.xlu0 %721
  %723 = vrot.lane.b32.xlu0 %v668, 32
  %v724 = vpop.permute.xlu0 %723
  %725 = vrot.lane.b32.xlu0 %v676, 32
  %v726 = vpop.permute.xlu0 %725
  %727 = vrot.lane.b32.xlu0 %v684, 32
  %v728 = vpop.permute.xlu0 %727
  %729 = vrot.lane.b32.xlu0 %v692, 32
  %v730 = vpop.permute.xlu0 %729
  %731 = vrot.lane.b32.xlu0 %v700, 32
  %v732 = vpop.permute.xlu0 %731
  %vm751 = vcmask 1046528
  %v752 = vrot.slane %v508, 1
  %v753 = vrot.slane %v509, 1
  %v754 = vsel %vm751, %v752, %v753
  %v755 = vrot.slane %v510, 1
  %v756 = vsel %vm751, %v753, %v755
  %v757 = vrot.slane %v511, 1
  %v758 = vsel %vm751, %v755, %v757
  %v759 = vrot.slane %v512, 1
  %v760 = vsel %vm751, %v757, %v759
  %v761 = vrot.slane %v513, 1
  %v762 = vsel %vm751, %v759, %v761
  %v763 = vrot.slane %v514, 1
  %v764 = vsel %vm751, %v761, %v763
  %v765 = vrot.slane %v515, 1
  %v766 = vsel %vm751, %v763, %v765
  %v767 = vrot.slane %v524, 1
  %v768 = vsel %vm751, %v765, %v767
  %v769 = vrot.slane %v540, 1
  %v770 = vrot.slane %v541, 1
  %v771 = vsel %vm751, %v769, %v770
  %v772 = vrot.slane %v542, 1
  %v773 = vsel %vm751, %v770, %v772
  %v774 = vrot.slane %v543, 1
  %v775 = vsel %vm751, %v772, %v774
  %v776 = vrot.slane %v544, 1
  %v777 = vsel %vm751, %v774, %v776
  %v778 = vrot.slane %v545, 1
  %v779 = vsel %vm751, %v776, %v778
  %v780 = vrot.slane %v546, 1
  %v781 = vsel %vm751, %v778, %v780
  %v782 = vrot.slane %v547, 1
  %v783 = vsel %vm751, %v780, %v782
  %v784 = vrot.slane %v556, 1
  %v785 = vsel %vm751, %v782, %v784
  %786 = vrot.lane.b32.xlu0 %v754, 64
  %v787 = vpop.permute.xlu0 %786
  %788 = vrot.lane.b32.xlu0 %v756, 64
  %v789 = vpop.permute.xlu0 %788
  %790 = vrot.lane.b32.xlu0 %v758, 64
  %v791 = vpop.permute.xlu0 %790
  %792 = vrot.lane.b32.xlu0 %v760, 64
  %v793 = vpop.permute.xlu0 %792
  %794 = vrot.lane.b32.xlu0 %v762, 64
  %v795 = vpop.permute.xlu0 %794
  %796 = vrot.lane.b32.xlu0 %v764, 64
  %v797 = vpop.permute.xlu0 %796
  %798 = vrot.lane.b32.xlu0 %v766, 64
  %v799 = vpop.permute.xlu0 %798
  %800 = vrot.lane.b32.xlu0 %v768, 64
  %v801 = vpop.permute.xlu0 %800
  %802 = vrot.lane.b32.xlu0 %v771, 64
  %v803 = vpop.permute.xlu0 %802
  %804 = vrot.lane.b32.xlu0 %v773, 64
  %v805 = vpop.permute.xlu0 %804
  %806 = vrot.lane.b32.xlu0 %v775, 64
  %v807 = vpop.permute.xlu0 %806
  %808 = vrot.lane.b32.xlu0 %v777, 64
  %v809 = vpop.permute.xlu0 %808
  %810 = vrot.lane.b32.xlu0 %v779, 64
  %v811 = vpop.permute.xlu0 %810
  %812 = vrot.lane.b32.xlu0 %v781, 64
  %v813 = vpop.permute.xlu0 %812
  %814 = vrot.lane.b32.xlu0 %v783, 64
  %v815 = vpop.permute.xlu0 %814
  %816 = vrot.lane.b32.xlu0 %v785, 64
  %v817 = vpop.permute.xlu0 %816
  %vm818 = vsmask.f32 6400
  %v819 = vrot.slane %v566, 1
  %v820 = vrot.slane %v568, 2
  %v821 = vor.u32 %v819, %v820
  %v822 = vrot.slane %v577, 1
  %v823 = vrot.slane %v573, 2
  %v824 = vor.u32 %v822, %v823
  %v825 = vsel %vm818, %v821, %v824
  %v826 = vrot.slane %v585, 1
  %v827 = vrot.slane %v581, 2
  %v828 = vor.u32 %v826, %v827
  %v829 = vsel %vm818, %v824, %v828
  %v830 = vrot.slane %v593, 1
  %v831 = vrot.slane %v589, 2
  %v832 = vor.u32 %v830, %v831
  %v833 = vsel %vm818, %v828, %v832
  %v834 = vrot.slane %v601, 1
  %v835 = vrot.slane %v597, 2
  %v836 = vor.u32 %v834, %v835
  %v837 = vsel %vm818, %v832, %v836
  %v838 = vrot.slane %v609, 1
  %v839 = vrot.slane %v605, 2
  %v840 = vor.u32 %v838, %v839
  %v841 = vsel %vm818, %v836, %v840
  %v842 = vrot.slane %v617, 1
  %v843 = vrot.slane %v613, 2
  %v844 = vor.u32 %v842, %v843
  %v845 = vsel %vm818, %v840, %v844
  %v846 = vrot.slane %v625, 1
  %v847 = vrot.slane %v621, 2
  %v848 = vor.u32 %v846, %v847
  %v849 = vsel %vm818, %v844, %v848
  %v850 = vshrl.u32 %v524, 16
  %v852 = vrot.slane %v850, 1
  %v853 = vrot.slane %v629, 2
  %v854 = vor.u32 %v852, %v853
  %v855 = vsel %vm818, %v848, %v854
  %v856 = vrot.slane %v634, 1
  %v857 = vrot.slane %v636, 2
  %v858 = vor.u32 %v856, %v857
  %v859 = vrot.slane %v645, 1
  %v860 = vrot.slane %v641, 2
  %v861 = vor.u32 %v859, %v860
  %v862 = vsel %vm818, %v858, %v861
  %v863 = vrot.slane %v653, 1
  %v864 = vrot.slane %v649, 2
  %v865 = vor.u32 %v863, %v864
  %v866 = vsel %vm818, %v861, %v865
  %v867 = vrot.slane %v661, 1
  %v868 = vrot.slane %v657, 2
  %v869 = vor.u32 %v867, %v868
  %v870 = vsel %vm818, %v865, %v869
  %v871 = vrot.slane %v669, 1
  %v872 = vrot.slane %v665, 2
  %v873 = vor.u32 %v871, %v872
  %v874 = vsel %vm818, %v869, %v873
  %v875 = vrot.slane %v677, 1
  %v876 = vrot.slane %v673, 2
  %v877 = vor.u32 %v875, %v876
  %v878 = vsel %vm818, %v873, %v877
  %v879 = vrot.slane %v685, 1
  %v880 = vrot.slane %v681, 2
  %v881 = vor.u32 %v879, %v880
  %v882 = vsel %vm818, %v877, %v881
  %v883 = vrot.slane %v693, 1
  %v884 = vrot.slane %v689, 2
  %v885 = vor.u32 %v883, %v884
  %v886 = vsel %vm818, %v881, %v885
  %v887 = vshrl.u32 %v556, 16
  %v889 = vrot.slane %v887, 1
  %v890 = vrot.slane %v697, 2
  %v891 = vor.u32 %v889, %v890
  %v892 = vsel %vm818, %v885, %v891
  %893 = vrot.lane.b32.xlu0 %v825, 96
  %v894 = vpop.permute.xlu0 %893
  %895 = vrot.lane.b32.xlu0 %v829, 96
  %v896 = vpop.permute.xlu0 %895
  %897 = vrot.lane.b32.xlu0 %v833, 96
  %v898 = vpop.permute.xlu0 %897
  %899 = vrot.lane.b32.xlu0 %v837, 96
  %v900 = vpop.permute.xlu0 %899
  %901 = vrot.lane.b32.xlu0 %v841, 96
  %v902 = vpop.permute.xlu0 %901
  %903 = vrot.lane.b32.xlu0 %v845, 96
  %v904 = vpop.permute.xlu0 %903
  %905 = vrot.lane.b32.xlu0 %v849, 96
  %v906 = vpop.permute.xlu0 %905
  %907 = vrot.lane.b32.xlu0 %v855, 96
  %v908 = vpop.permute.xlu0 %907
  %909 = vrot.lane.b32.xlu0 %v862, 96
  %v910 = vpop.permute.xlu0 %909
  %911 = vrot.lane.b32.xlu0 %v866, 96
  %v912 = vpop.permute.xlu0 %911
  %913 = vrot.lane.b32.xlu0 %v870, 96
  %v914 = vpop.permute.xlu0 %913
  %915 = vrot.lane.b32.xlu0 %v874, 96
  %v916 = vpop.permute.xlu0 %915
  %917 = vrot.lane.b32.xlu0 %v878, 96
  %v918 = vpop.permute.xlu0 %917
  %919 = vrot.lane.b32.xlu0 %v882, 96
  %v920 = vpop.permute.xlu0 %919
  %921 = vrot.lane.b32.xlu0 %v886, 96
  %v922 = vpop.permute.xlu0 %921
  %923 = vrot.lane.b32.xlu0 %v892, 96
  %v924 = vpop.permute.xlu0 %923
  %vm925 = vcmask 261120
  %v927 = vsel %vm925, %v508, %v702
  %v929 = vsel %vm925, %v509, %v704
  %v931 = vsel %vm925, %v510, %v706
  %v933 = vsel %vm925, %v511, %v708
  %v935 = vsel %vm925, %v512, %v710
  %v937 = vsel %vm925, %v513, %v712
  %v939 = vsel %vm925, %v514, %v714
  %v941 = vsel %vm925, %v515, %v716
  %v943 = vsel %vm925, %v540, %v718
  %v945 = vsel %vm925, %v541, %v720
  %v947 = vsel %vm925, %v542, %v722
  %v949 = vsel %vm925, %v543, %v724
  %v951 = vsel %vm925, %v544, %v726
  %v953 = vsel %vm925, %v545, %v728
  %v955 = vsel %vm925, %v546, %v730
  %v957 = vsel %vm925, %v547, %v732
  %vm958 = vcmask 523264
  %v960 = vsel %vm958, %v927, %v787
  %v962 = vsel %vm958, %v929, %v789
  %v964 = vsel %vm958, %v931, %v791
  %v966 = vsel %vm958, %v933, %v793
  %v968 = vsel %vm958, %v935, %v795
  %v970 = vsel %vm958, %v937, %v797
  %v972 = vsel %vm958, %v939, %v799
  %v974 = vsel %vm958, %v941, %v801
  %v976 = vsel %vm958, %v943, %v803
  %v978 = vsel %vm958, %v945, %v805
  %v980 = vsel %vm958, %v947, %v807
  %v982 = vsel %vm958, %v949, %v809
  %v984 = vsel %vm958, %v951, %v811
  %v986 = vsel %vm958, %v953, %v813
  %v988 = vsel %vm958, %v955, %v815
  %v990 = vsel %vm958, %v957, %v817
  %vm991 = vcmask 785408
  %v993 = vsel %vm991, %v960, %v894
  %v996 = vsel %vm991, %v962, %v896
  %v999 = vsel %vm991, %v964, %v898
  %v1002 = vsel %vm991, %v966, %v900
  %v1005 = vsel %vm991, %v968, %v902
  %v1008 = vsel %vm991, %v970, %v904
  %v1011 = vsel %vm991, %v972, %v906
  %v1014 = vsel %vm991, %v974, %v908
  %v1017 = vsel %vm991, %v976, %v910
  %v1020 = vsel %vm991, %v978, %v912
  %v1023 = vsel %vm991, %v980, %v914
  %v1026 = vsel %vm991, %v982, %v916
  %v1029 = vsel %vm991, %v984, %v918
  %v1032 = vsel %vm991, %v986, %v920
  %v1035 = vsel %vm991, %v988, %v922
  %v1038 = vsel %vm991, %v990, %v924
  %v1040 = vld [vmem:[%s2] sm:$0xf]
  %v1041 = vld [vmem:[%s2 + $0x4] sm:$0xf]
  %v1042 = vld [vmem:[%s2 + $0x8] sm:$0xf]
  %v1043 = vld [vmem:[%s2 + $0xc] sm:$0xf]
  %v1044 = vld [vmem:[%s2 + $0x10] sm:$0xf]
  %v1045 = vld [vmem:[%s2 + $0x14] sm:$0xf]
  %v1046 = vld [vmem:[%s2 + $0x18] sm:$0xf]
  %v1047 = vld [vmem:[%s2 + $0x1c] sm:$0xf]
  %v1048 = vld [vmem:[%s2 + $0x20] sm:$0xf]
  %v1049 = vld [vmem:[%s2 + $0x24] sm:$0xf]
  %v1050 = vld [vmem:[%s2 + $0x28] sm:$0xf]
  %v1051 = vld [vmem:[%s2 + $0x2c] sm:$0xf]
  %v1052 = vld [vmem:[%s2 + $0x30] sm:$0xf]
  %v1053 = vld [vmem:[%s2 + $0x34] sm:$0xf]
  %v1054 = vld [vmem:[%s2 + $0x38] sm:$0xf]
  %v1055 = vld [vmem:[%s2 + $0x3c] sm:$0xf]
  %v1072 = vunpack.c.l.b16 %v1040
  %v1073 = vunpack.c.l.b16 %v1041
  %v1074 = vunpack.c.l.b16 %v1042
  %v1075 = vunpack.c.l.b16 %v1043
  %v1076 = vunpack.c.l.b16 %v1044
  %v1077 = vunpack.c.l.b16 %v1045
  %v1078 = vunpack.c.l.b16 %v1046
  %v1079 = vunpack.c.l.b16 %v1047
  %v1080 = vunpack.c.l.b16 %v1048
  %v1081 = vunpack.c.l.b16 %v1049
  %v1082 = vunpack.c.l.b16 %v1050
  %v1083 = vunpack.c.l.b16 %v1051
  %v1084 = vunpack.c.l.b16 %v1052
  %v1085 = vunpack.c.l.b16 %v1053
  %v1086 = vunpack.c.l.b16 %v1054
  %v1087 = vunpack.c.l.b16 %v1055
  %v1088 = vpack.c.b16 %v1073, %v1072
  %v1089 = vpack.c.b16 %v1075, %v1074
  %v1090 = vpack.c.b16 %v1077, %v1076
  %v1091 = vpack.c.b16 %v1079, %v1078
  %v1092 = vpack.c.b16 %v1081, %v1080
  %v1093 = vpack.c.b16 %v1083, %v1082
  %v1094 = vpack.c.b16 %v1085, %v1084
  %v1095 = vpack.c.b16 %v1087, %v1086
  %1104 = vmatprep.subr.bf16.mxu0 0
  %1105 = vmatpush1.bf16.msra.mxu0 %v1088
  %1106 = vmatprep.subr.bf16.mxu0 0
  %1107 = vmatpush1.bf16.msra.mxu0 %v1089
  %1108 = vmatprep.subr.bf16.mxu0 0
  %1109 = vmatpush1.bf16.msra.mxu0 %v1090
  %1110 = vmatprep.subr.bf16.mxu0 0
  %1111 = vmatpush1.bf16.msra.mxu0 %v1091
  %1112 = vmatprep.subr.bf16.mxu0 0
  %1113 = vmatpush1.bf16.msra.mxu0 %v1092
  %1114 = vmatprep.subr.bf16.mxu0 0
  %1115 = vmatpush1.bf16.msra.mxu0 %v1093
  %1116 = vmatprep.subr.bf16.mxu0 0
  %1117 = vmatpush1.bf16.msra.mxu0 %v1094
  %1118 = vmatprep.subr.bf16.mxu0 0
  %1119 = vmatpush1.bf16.msra.mxu0 %v1095
  %1120 = vmatprep.subr.bf16.mxu0 0
  %1121 = vmatpush1.bf16.msra.mxu0 0
  %1122 = vmatprep.subr.bf16.mxu0 0
  %1123 = vmatpush1.bf16.msra.mxu0 0
  %1124 = vmatprep.subr.bf16.mxu0 0
  %1125 = vmatpush1.bf16.msra.mxu0 0
  %1126 = vmatprep.subr.bf16.mxu0 0
  %1127 = vmatpush1.bf16.msra.mxu0 0
  %1128 = vmatprep.subr.bf16.mxu0 0
  %1129 = vmatpush1.bf16.msra.mxu0 0
  %1130 = vmatprep.subr.bf16.mxu0 0
  %1131 = vmatpush1.bf16.msra.mxu0 0
  %1132 = vmatprep.subr.bf16.mxu0 0
  %1133 = vmatpush1.bf16.msra.mxu0 0
  %1134 = vmatprep.subr.bf16.mxu0 0
  %1135 = vmatpush1.bf16.msra.mxu0 0
  %1136 = vmatprep.mubr.bf16.mxu0 0
  %1137 = vmatmul.mubr.bf16.gmra.mrb[0].mxu0 %v993
  %v1138 = vpop.f32.mrb[0].mxu0
  %v1139 = vadd.f32 0.0, %v1138
  %v1140 = vpop.f32.mrb[0].mxu0
  %v1141 = vpop.f32.mrb[0].mxu0
  %v1142 = vadd.f32 0.0, %v1141
  %v1143 = vpop.f32.mrb[0].mxu0
  %1144 = vmatprep.mubr.bf16.mxu0 0
  %1145 = vmatmul.mubr.bf16.gmra.mrb[0].mxu0 %v996
  %v1146 = vpop.f32.mrb[0].mxu0
  %v1147 = vadd.f32 0.0, %v1146
  %v1148 = vpop.f32.mrb[0].mxu0
  %v1149 = vpop.f32.mrb[0].mxu0
  %v1150 = vadd.f32 0.0, %v1149
  %v1151 = vpop.f32.mrb[0].mxu0
  %1152 = vmatprep.mubr.bf16.mxu0 0
  %1153 = vmatmul.mubr.bf16.gmra.mrb[0].mxu0 %v999
  %v1154 = vpop.f32.mrb[0].mxu0
  %v1155 = vadd.f32 0.0, %v1154
  %v1156 = vpop.f32.mrb[0].mxu0
  %v1157 = vpop.f32.mrb[0].mxu0
  %v1158 = vadd.f32 0.0, %v1157
  %v1159 = vpop.f32.mrb[0].mxu0
  %1160 = vmatprep.mubr.bf16.mxu0 0
  %1161 = vmatmul.mubr.bf16.gmra.mrb[0].mxu0 %v1002
  %v1162 = vpop.f32.mrb[0].mxu0
  %v1163 = vadd.f32 0.0, %v1162
  %v1164 = vpop.f32.mrb[0].mxu0
  %v1165 = vpop.f32.mrb[0].mxu0
  %v1166 = vadd.f32 0.0, %v1165
  %v1167 = vpop.f32.mrb[0].mxu0
  %1168 = vmatprep.mubr.bf16.mxu0 0
  %1169 = vmatmul.mubr.bf16.gmra.mrb[0].mxu0 %v1005
  %v1170 = vpop.f32.mrb[0].mxu0
  %v1171 = vadd.f32 0.0, %v1170
  %v1172 = vpop.f32.mrb[0].mxu0
  %v1173 = vpop.f32.mrb[0].mxu0
  %v1174 = vadd.f32 0.0, %v1173
  %v1175 = vpop.f32.mrb[0].mxu0
  %1176 = vmatprep.mubr.bf16.mxu0 0
  %1177 = vmatmul.mubr.bf16.gmra.mrb[0].mxu0 %v1008
  %v1178 = vpop.f32.mrb[0].mxu0
  %v1179 = vadd.f32 0.0, %v1178
  %v1180 = vpop.f32.mrb[0].mxu0
  %v1181 = vpop.f32.mrb[0].mxu0
  %v1182 = vadd.f32 0.0, %v1181
  %v1183 = vpop.f32.mrb[0].mxu0
  %1184 = vmatprep.mubr.bf16.mxu0 0
  %1185 = vmatmul.mubr.bf16.gmra.mrb[0].mxu0 %v1011
  %v1186 = vpop.f32.mrb[0].mxu0
  %v1187 = vadd.f32 0.0, %v1186
  %v1188 = vpop.f32.mrb[0].mxu0
  %v1189 = vpop.f32.mrb[0].mxu0
  %v1190 = vadd.f32 0.0, %v1189
  %v1191 = vpop.f32.mrb[0].mxu0
  %1192 = vmatprep.mubr.bf16.mxu0 0
  %1193 = vmatmul.mubr.bf16.gmra.mrb[0].mxu0 %v1014
  %v1194 = vpop.f32.mrb[0].mxu0
  %v1195 = vadd.f32 0.0, %v1194
  %v1196 = vpop.f32.mrb[0].mxu0
  %v1197 = vpop.f32.mrb[0].mxu0
  %v1198 = vadd.f32 0.0, %v1197
  %v1199 = vpop.f32.mrb[0].mxu0
  %1200 = vmatprep.mubr.bf16.mxu0 0
  %1201 = vmatmul.mubr.bf16.gmra.mrb[0].mxu0 %v1017
  %v1202 = vpop.f32.mrb[0].mxu0
  %v1203 = vadd.f32 0.0, %v1202
  %v1204 = vpop.f32.mrb[0].mxu0
  %v1205 = vpop.f32.mrb[0].mxu0
  %v1206 = vadd.f32 0.0, %v1205
  %v1207 = vpop.f32.mrb[0].mxu0
  %1208 = vmatprep.mubr.bf16.mxu0 0
  %1209 = vmatmul.mubr.bf16.gmra.mrb[0].mxu0 %v1020
  %v1210 = vpop.f32.mrb[0].mxu0
  %v1211 = vadd.f32 0.0, %v1210
  %v1212 = vpop.f32.mrb[0].mxu0
  %v1213 = vpop.f32.mrb[0].mxu0
  %v1214 = vadd.f32 0.0, %v1213
  %v1215 = vpop.f32.mrb[0].mxu0
  %1216 = vmatprep.mubr.bf16.mxu0 0
  %1217 = vmatmul.mubr.bf16.gmra.mrb[0].mxu0 %v1023
  %v1218 = vpop.f32.mrb[0].mxu0
  %v1219 = vadd.f32 0.0, %v1218
  %v1220 = vpop.f32.mrb[0].mxu0
  %v1221 = vpop.f32.mrb[0].mxu0
  %v1222 = vadd.f32 0.0, %v1221
  %v1223 = vpop.f32.mrb[0].mxu0
  %1224 = vmatprep.mubr.bf16.mxu0 0
  %1225 = vmatmul.mubr.bf16.gmra.mrb[0].mxu0 %v1026
  %v1226 = vpop.f32.mrb[0].mxu0
  %v1227 = vadd.f32 0.0, %v1226
  %v1228 = vpop.f32.mrb[0].mxu0
  %v1229 = vpop.f32.mrb[0].mxu0
  %v1230 = vadd.f32 0.0, %v1229
  %v1231 = vpop.f32.mrb[0].mxu0
  %1232 = vmatprep.mubr.bf16.mxu0 0
  %1233 = vmatmul.mubr.bf16.gmra.mrb[0].mxu0 %v1029
  %v1234 = vpop.f32.mrb[0].mxu0
  %v1235 = vadd.f32 0.0, %v1234
  %v1236 = vpop.f32.mrb[0].mxu0
  %v1237 = vpop.f32.mrb[0].mxu0
  %v1238 = vadd.f32 0.0, %v1237
  %v1239 = vpop.f32.mrb[0].mxu0
  %1240 = vmatprep.mubr.bf16.mxu0 0
  %1241 = vmatmul.mubr.bf16.gmra.mrb[0].mxu0 %v1032
  %v1242 = vpop.f32.mrb[0].mxu0
  %v1243 = vadd.f32 0.0, %v1242
  %v1244 = vpop.f32.mrb[0].mxu0
  %v1245 = vpop.f32.mrb[0].mxu0
  %v1246 = vadd.f32 0.0, %v1245
  %v1247 = vpop.f32.mrb[0].mxu0
  %1248 = vmatprep.mubr.bf16.mxu0 0
  %1249 = vmatmul.mubr.bf16.gmra.mrb[0].mxu0 %v1035
  %v1250 = vpop.f32.mrb[0].mxu0
  %v1251 = vadd.f32 0.0, %v1250
  %v1252 = vpop.f32.mrb[0].mxu0
  %v1253 = vpop.f32.mrb[0].mxu0
  %v1254 = vadd.f32 0.0, %v1253
  %v1255 = vpop.f32.mrb[0].mxu0
  %1256 = vmatprep.mubr.bf16.mxu0 0
  %1257 = vmatmul.mubr.bf16.gmra.mrb[0].mxu0 %v1038
  %v1258 = vpop.f32.mrb[0].mxu0
  %v1259 = vadd.f32 0.0, %v1258
  %v1260 = vpop.f32.mrb[0].mxu0
  %v1261 = vpop.f32.mrb[0].mxu0
  %v1262 = vadd.f32 0.0, %v1261
  %v1263 = vpop.f32.mrb[0].mxu0
  %1264 = vdwg.mxu0
  %1265 = vxpose.xlu0.b32.start [1/16] %v1139, 128
  %1266 = vxpose.xlu0.b32.cont [2/16] %v1142, 128
  %1267 = vxpose.xlu0.b32.cont [3/16] %v1147, 128
  %1268 = vxpose.xlu0.b32.cont [4/16] %v1150, 128
  %1269 = vxpose.xlu0.b32.cont [5/16] %v1155, 128
  %1270 = vxpose.xlu0.b32.cont [6/16] %v1158, 128
  %1271 = vxpose.xlu0.b32.cont [7/16] %v1163, 128
  %1272 = vxpose.xlu0.b32.cont [8/16] %v1166, 128
  %1273 = vxpose.xlu0.b32.cont [9/16] %v1171, 128
  %1274 = vxpose.xlu0.b32.cont [10/16] %v1174, 128
  %1275 = vxpose.xlu0.b32.cont [11/16] %v1179, 128
  %1276 = vxpose.xlu0.b32.cont [12/16] %v1182, 128
  %1277 = vxpose.xlu0.b32.cont [13/16] %v1187, 128
  %1278 = vxpose.xlu0.b32.cont [14/16] %v1190, 128
  %1279 = vxpose.xlu0.b32.cont [15/16] %v1195, 128
  %1280 = vxpose.xlu0.b32.end [16/16] %v1198, 128
  %v1281 = vpop.trf.xlu0
  %v1282 = vpop.trf.xlu0
  %v1283 = vpop.trf.xlu0
  %v1284 = vpop.trf.xlu0
  %v1285 = vpop.trf.xlu0
  %v1286 = vpop.trf.xlu0
  %v1287 = vpop.trf.xlu0
  %v1288 = vpop.trf.xlu0
  %v1289 = vpop.trf.xlu0
  %v1290 = vpop.trf.xlu0
  %v1291 = vpop.trf.xlu0
  %v1292 = vpop.trf.xlu0
  %v1293 = vpop.trf.xlu0
  %v1294 = vpop.trf.xlu0
  %v1295 = vpop.trf.xlu0
  %v1296 = vpop.trf.xlu0
  %1297 = vxpose.xlu0.b32.start [1/16] %v1203, 128
  %1298 = vxpose.xlu0.b32.cont [2/16] %v1206, 128
  %1299 = vxpose.xlu0.b32.cont [3/16] %v1211, 128
  %1300 = vxpose.xlu0.b32.cont [4/16] %v1214, 128
  %1301 = vxpose.xlu0.b32.cont [5/16] %v1219, 128
  %1302 = vxpose.xlu0.b32.cont [6/16] %v1222, 128
  %1303 = vxpose.xlu0.b32.cont [7/16] %v1227, 128
  %1304 = vxpose.xlu0.b32.cont [8/16] %v1230, 128
  %1305 = vxpose.xlu0.b32.cont [9/16] %v1235, 128
  %1306 = vxpose.xlu0.b32.cont [10/16] %v1238, 128
  %1307 = vxpose.xlu0.b32.cont [11/16] %v1243, 128
  %1308 = vxpose.xlu0.b32.cont [12/16] %v1246, 128
  %1309 = vxpose.xlu0.b32.cont [13/16] %v1251, 128
  %1310 = vxpose.xlu0.b32.cont [14/16] %v1254, 128
  %1311 = vxpose.xlu0.b32.cont [15/16] %v1259, 128
  %1312 = vxpose.xlu0.b32.end [16/16] %v1262, 128
  %v1313 = vpop.trf.xlu0
  %v1314 = vpop.trf.xlu0
  %v1315 = vpop.trf.xlu0
  %v1316 = vpop.trf.xlu0
  %v1317 = vpop.trf.xlu0
  %v1318 = vpop.trf.xlu0
  %v1319 = vpop.trf.xlu0
  %v1320 = vpop.trf.xlu0
  %v1321 = vpop.trf.xlu0
  %v1322 = vpop.trf.xlu0
  %v1323 = vpop.trf.xlu0
  %v1324 = vpop.trf.xlu0
  %v1325 = vpop.trf.xlu0
  %v1326 = vpop.trf.xlu0
  %v1327 = vpop.trf.xlu0
  %v1328 = vpop.trf.xlu0
  %1329 = vst [vmem:[%s3] sm:$0xff] %v1281
  %1330 = vst [vmem:[%s3 + $0x8] sm:$0xff] %v1282
  %1331 = vst [vmem:[%s3 + $0x10] sm:$0xff] %v1283
  %1332 = vst [vmem:[%s3 + $0x18] sm:$0xff] %v1284
  %1333 = vst [vmem:[%s3 + $0x20] sm:$0xff] %v1285
  %1334 = vst [vmem:[%s3 + $0x28] sm:$0xff] %v1286
  %1335 = vst [vmem:[%s3 + $0x30] sm:$0xff] %v1287
  %1336 = vst [vmem:[%s3 + $0x38] sm:$0xff] %v1288
  %1337 = vst [vmem:[%s3 + $0x40] sm:$0xff] %v1313
  %1338 = vst [vmem:[%s3 + $0x48] sm:$0xff] %v1314
  %1339 = vst [vmem:[%s3 + $0x50] sm:$0xff] %v1315
  %1340 = vst [vmem:[%s3 + $0x58] sm:$0xff] %v1316
  %1341 = vst [vmem:[%s3 + $0x60] sm:$0xff] %v1317
  %1342 = vst [vmem:[%s3 + $0x68] sm:$0xff] %v1318
  %1343 = vst [vmem:[%s3 + $0x70] sm:$0xff] %v1319
  %1344 = vst [vmem:[%s3 + $0x78] sm:$0xff] %v1320
  // Predicated region
  $region14: #{_encoder_forward.1} parent=0 // pred_check
    _
  $region15: #{_encoder_forward.1} parent=0 // pred_check_branch
    %1346 = sbr.rel (0) target = $region17
  $region16: #{_encoder_forward.1} parent=0 // pred_region
    _
  $region17: #{_encoder_forward.1} parent=0 // pred_fallthru
    _
  // Predicated region
  $region18: #{_encoder_forward.1} parent=0 // pred_check
    _
  $region19: #{_encoder_forward.1} parent=0 // pred_check_branch
    %1348 = sbr.rel (0) target = $region21
  $region20: #{_encoder_forward.1} parent=0 // pred_region
    _
  $region21: #{_encoder_forward.1} parent=0 // pred_fallthru
    _

</llo_original>
